<compile_context>
chip_gen: v6e
topology: v6e:2x2x1
jax: 0.10.0
libtpu: 0.0.40
codegen_flags: <defaults>
</compile_context>

<pallas_src>
import functools

import jax
import jax.numpy as jnp
from jax import lax
from jax.experimental import pallas as pl
from jax.experimental.pallas import tpu as pltpu


def _poisson_prior_kernel(logit_ref, zprev_ref, gumbel_ref, o_ref, *, tau):
    # logit_ref:  (1,)      f32 in SMEM (scalar transition logit)
    # zprev_ref:  (B, T, K) f32 in VMEM (z shifted down one step; row 0 is dummy)
    # gumbel_ref: (B, T, K) f32 in VMEM (standard Gumbel noise)
    # o_ref:      (B, T, K) f32 in VMEM (relaxed categorical sample)
    B, T, K = zprev_ref.shape

    # --- transition matrix A from the scalar logit (built in-kernel) ---------
    logit_kk = jnp.full((K, K), logit_ref[0], dtype=jnp.float32)
    p_kk = 1.0 / (1.0 + jnp.exp(-0.1 * logit_kk))            # sigmoid, vector EUP
    off_kk = (1.0 - p_kk) * jnp.float32(1.0 / (K - 1))       # note: requires K > 1
    ri = lax.broadcasted_iota(jnp.int32, (K, K), 0)
    ci = lax.broadcasted_iota(jnp.int32, (K, K), 1)
    A = jnp.where(ri == ci, p_kk, off_kk)                    # (K, K)

    # --- one MXU matmul over the whole flattened batch -----------------------
    zprev = zprev_ref[...].reshape(B * T, K)
    target = jnp.dot(zprev, A, preferred_element_type=jnp.float32)
    target = target.reshape(B, T, K)

    # t == 0 rows are the fixed uniform prior 1/K (exact, overwrites the dummy
    # first row that the wrapper placed in z_prev).
    t_idx = lax.broadcasted_iota(jnp.int32, (B, T, K), 1)
    shifted = jnp.where(t_idx == 0, jnp.float32(1.0 / K), target)

    # --- relaxed categorical (Gumbel-softmax) sample, temperature tau --------
    y = (jnp.log(shifted) + gumbel_ref[...]) * jnp.float32(1.0 / tau)
    y = y - jnp.max(y, axis=-1, keepdims=True)
    e = jnp.exp(y)
    denom = jnp.sum(e, axis=-1, keepdims=True)
    # Plain divide kept (portable across Mosaic and interpret); negligible at
    # this size versus the approx-reciprocal EUP path.
    o_ref[...] = (e / denom).astype(o_ref.dtype)


def poisson_prior_forward(z, logits, noise_key, *, tau):
    """z: (B, T, K) f32 state posteriors, logits: (1,) f32, noise_key: PRNG key."""
    B, T, K = z.shape
    z = z.astype(jnp.float32)

    # One-step time shift as wrapper-side layout plumbing only; the content of
    # row 0 is irrelevant (overwritten with exact 1/K inside the kernel).
    z0 = jnp.full((B, 1, K), 1.0 / K, dtype=jnp.float32)
    z_prev = jnp.concatenate([z0, z[:, :-1, :]], axis=1)

    # Single Gumbel draw for the whole block (one stream, no per-batch reseed).
    # TODO(synk): Sample_Categorical source not given; standard Gumbel-softmax
    # with temperature tau is assumed (same as the previous version).
    gumbel = jax.random.gumbel(noise_key, (B, T, K), dtype=jnp.float32)

    kernel = functools.partial(_poisson_prior_kernel, tau=float(tau))
    return pl.pallas_call(
        kernel,
        out_shape=jax.ShapeDtypeStruct((B, T, K), jnp.float32),
        in_specs=[
            pl.BlockSpec(memory_space=pltpu.MemorySpace.SMEM),   # scalar logit
            pl.BlockSpec(memory_space=pltpu.MemorySpace.VMEM),   # z_prev
            pl.BlockSpec(memory_space=pltpu.MemorySpace.VMEM),   # gumbel noise
        ],
        out_specs=pl.BlockSpec(memory_space=pltpu.MemorySpace.VMEM),
    )(logits.astype(jnp.float32), z_prev, gumbel)


def _reference(z, logits, gumbel, tau):
    """Pure-JAX reference mirroring the PyTorch forward."""
    B, T, K = z.shape
    p = jax.nn.sigmoid(0.1 * logits.astype(jnp.float32))      # (1,)
    eye = jnp.eye(K, dtype=jnp.float32)
    A = (1.0 - eye) * ((1.0 - p) / (K - 1)) + eye * p
    target = jnp.matmul(z, A)
    z0 = jnp.full((B, 1, K), 1.0 / K, dtype=jnp.float32)
    target = jnp.concatenate([z0, target[:, :-1, :]], axis=1)
    return jax.nn.softmax((jnp.log(target) + gumbel) / tau, axis=-1)


if __name__ == "__main__":
    B, T, K = 2, 16, 8
    tau = 0.5

    key = jax.random.PRNGKey(0)
    k_logits, k_z, k_noise = jax.random.split(key, 3)

    # Deterministic parameter init (mirrors nn.init.normal_ on a scalar logit).
    logits = jax.random.normal(k_logits, (1,), dtype=jnp.float32)

    # Rows on the simplex, as an HMM state posterior input z.
    z = jax.nn.softmax(jax.random.normal(k_z, (B, T, K), dtype=jnp.float32), axis=-1)

    out = poisson_prior_forward(z, logits, k_noise, tau=tau)
    out = jax.block_until_ready(out)

    assert out.shape == (B, T, K)
    assert bool(jnp.all(jnp.isfinite(out)))
    # Gumbel-softmax output rows sum to 1.
    assert bool(jnp.allclose(jnp.sum(out, axis=-1), 1.0, atol=1e-4))

    # Same noise stream -> kernel must match the pure-JAX reference closely.
    ref = _reference(z, logits,
                     jax.random.gumbel(k_noise, (B, T, K), dtype=jnp.float32), tau)
    assert bool(jnp.allclose(out, ref, atol=2e-2, rtol=2e-2))

    print("KERNEL_OK")
</pallas_src>

<mosaic_0001>
module attributes {stable_mosaic.version = 11 : i64} {
  func.func @_poisson_prior_kernel(%arg0: memref<1xf32, #tpu.memory_space<smem>>, %arg1: memref<2x16x8xf32, #tpu.memory_space<vmem>>, %arg2: memref<2x16x8xf32, #tpu.memory_space<vmem>>, %arg3: memref<2x16x8xf32, #tpu.memory_space<vmem>>) attributes {dimension_semantics = [], scalar_prefetch = 0 : i64, scratch_operands = 0 : i64, tpu.core_type = #tpu.core_type<tc>} {
    %c0 = arith.constant 0 : index
    %0 = memref.load %arg0[%c0] : memref<1xf32, #tpu.memory_space<smem>>
    %1 = vector.broadcast %0 : f32 to vector<8x8xf32>
    %cst = arith.constant -1.000000e-01 : f32
    %2 = vector.broadcast %cst : f32 to vector<8x8xf32>
    %3 = arith.mulf %2, %1 : vector<8x8xf32>
    %4 = math.exp %3 : vector<8x8xf32>
    %cst_0 = arith.constant 1.000000e+00 : f32
    %5 = vector.broadcast %cst_0 : f32 to vector<8x8xf32>
    %6 = arith.addf %5, %4 : vector<8x8xf32>
    %cst_1 = arith.constant 1.000000e+00 : f32
    %7 = vector.broadcast %cst_1 : f32 to vector<8x8xf32>
    %8 = arith.divf %7, %6 : vector<8x8xf32>
    %cst_2 = arith.constant 1.000000e+00 : f32
    %9 = vector.broadcast %cst_2 : f32 to vector<8x8xf32>
    %10 = arith.subf %9, %8 : vector<8x8xf32>
    %cst_3 = arith.constant 0.142857149 : f32
    %11 = vector.broadcast %cst_3 : f32 to vector<8x8xf32>
    %12 = arith.mulf %10, %11 : vector<8x8xf32>
    %13 = tpu.iota {dimensions = array<i32: 0>} : vector<8x8xi32>
    %14 = tpu.iota {dimensions = array<i32: 1>} : vector<8x8xi32>
    %15 = arith.cmpi eq, %13, %14 : vector<8x8xi32>
    %16 = arith.select %15, %8, %12 : vector<8x8xi1>, vector<8x8xf32>
    %c0_4 = arith.constant 0 : index
    %c0_5 = arith.constant 0 : index
    %c0_6 = arith.constant 0 : index
    %17 = vector.load %arg1[%c0_4, %c0_5, %c0_6] : memref<2x16x8xf32, #tpu.memory_space<vmem>>, vector<2x16x8xf32>
    %18 = vector.shape_cast %17 : vector<2x16x8xf32> to vector<32x8xf32>
    %cst_7 = arith.constant dense<0.000000e+00> : vector<32x8xf32>
    %19 = tpu.matmul %18, %16, %cst_7 {dimension_numbers = #tpu.dot_dimension_numbers<[1], [0], [0], [1], [0, 0, 1, 1], [], []>} : vector<32x8xf32>, vector<8x8xf32>, vector<32x8xf32> -> vector<32x8xf32>
    %20 = vector.shape_cast %19 : vector<32x8xf32> to vector<2x16x8xf32>
    %21 = tpu.iota {dimensions = array<i32: 1>} : vector<2x16x8xi32>
    %c0_i32 = arith.constant 0 : i32
    %22 = vector.broadcast %c0_i32 : i32 to vector<2x16x8xi32>
    %23 = arith.cmpi eq, %21, %22 : vector<2x16x8xi32>
    %cst_8 = arith.constant 1.250000e-01 : f32
    %24 = vector.broadcast %cst_8 : f32 to vector<2x16x8xf32>
    %25 = arith.select %23, %24, %20 : vector<2x16x8xi1>, vector<2x16x8xf32>
    %26 = math.log %25 : vector<2x16x8xf32>
    %c0_9 = arith.constant 0 : index
    %c0_10 = arith.constant 0 : index
    %c0_11 = arith.constant 0 : index
    %27 = vector.load %arg2[%c0_9, %c0_10, %c0_11] : memref<2x16x8xf32, #tpu.memory_space<vmem>>, vector<2x16x8xf32>
    %28 = arith.addf %26, %27 : vector<2x16x8xf32>
    %cst_12 = arith.constant 2.000000e+00 : f32
    %29 = vector.broadcast %cst_12 : f32 to vector<2x16x8xf32>
    %30 = arith.mulf %28, %29 : vector<2x16x8xf32>
    %cst_13 = arith.constant dense<0xFF800000> : vector<2x16xf32>
    %31 = vector.multi_reduction <maximumf>, %30, %cst_13 [2] : vector<2x16x8xf32> to vector<2x16xf32>
    %32 = vector.shape_cast %31 : vector<2x16xf32> to vector<2x16x1xf32>
    %33 = vector.broadcast %32 : vector<2x16x1xf32> to vector<2x16x8xf32>
    %34 = arith.subf %30, %33 : vector<2x16x8xf32>
    %35 = math.exp %34 : vector<2x16x8xf32>
    %cst_14 = arith.constant dense<0.000000e+00> : vector<2x16xf32>
    %36 = vector.multi_reduction <add>, %35, %cst_14 [2] : vector<2x16x8xf32> to vector<2x16xf32>
    %37 = vector.shape_cast %36 : vector<2x16xf32> to vector<2x16x1xf32>
    %38 = vector.broadcast %37 : vector<2x16x1xf32> to vector<2x16x8xf32>
    %39 = arith.divf %35, %38 : vector<2x16x8xf32>
    %c0_15 = arith.constant 0 : index
    %c0_16 = arith.constant 0 : index
    %c0_17 = arith.constant 0 : index
    %40 = vector.load %arg3[%c0_15, %c0_16, %c0_17] : memref<2x16x8xf32, #tpu.memory_space<vmem>>, vector<2x16x8xf32>
    tpu.vector_store %arg3[%c0_15, %c0_16, %c0_17], %39 {strides = array<i32>} : memref<2x16x8xf32, #tpu.memory_space<vmem>>, vector<2x16x8xf32>,
    return
  }
}

</mosaic_0001>

<llo_original>
// kernel: tpu_custom_call.1
$region0: #{tpu_custom_call.1}
  #allocation0 [shape = 'u32[]', space=smem, size = 0x4, offset = 0x4, fixed_abs, tag = 'smem constant byte address 0x4 - core index']
  #allocation1 [shape = 'u32[144,128]{1,0:T(1,128)}', space=vmem, size = 0x12000, scoped, tag = 'internal scratch']
  #allocation2 [shape = 'f32[1]{0:T(128)S(6)}', space=smem, size = 0x200, scoped, tag = 'scoped memory for tpu_custom_call.1']
  %s0 = inlined_call_operand.<no memory space> [shape: f32[1], index: 0, kind: input, shape index: {}]
  %s1 = inlined_call_operand.vmem [shape: f32[2,16,8], index: 1, kind: input, shape index: {}]
  %s2 = inlined_call_operand.vmem [shape: f32[2,16,8], index: 2, kind: input, shape index: {}]
  %s3 = inlined_call_operand.vmem [shape: f32[2,16,8], index: 3, kind: output, shape index: {}]
  %s4 = sld [smem:[#allocation0]]
  $region22: #{tpu_custom_call.1} parent=0
    _
  %s6 = ssub.s32 1, %s4
  %s7 = scalar_select 0, %s6, %s4
  %8 = sst [smem:[#allocation2]] %s0
  // Predicated region
  $region2: #{tpu_custom_call.1} parent=0 // pred_check
    _
  $region3: #{tpu_custom_call.1} parent=0 // pred_check_branch
    %10 = sbr.rel (0) target = $region5
  $region4: #{tpu_custom_call.1} parent=0 // pred_region
    _
  $region5: #{tpu_custom_call.1} parent=0 // pred_fallthru
    _
  // Predicated region
  $region6: #{tpu_custom_call.1} parent=0 // pred_check
    _
  $region7: #{tpu_custom_call.1} parent=0 // pred_check_branch
    %12 = sbr.rel (0) target = $region9
  $region8: #{tpu_custom_call.1} parent=0 // pred_region
    _
  $region9: #{tpu_custom_call.1} parent=0 // pred_fallthru
    _
  // Predicated region
  $region10: #{tpu_custom_call.1} parent=0 // pred_check
    _
  $region11: #{tpu_custom_call.1} parent=0 // pred_check_branch
    %14 = sbr.rel (0) target = $region13
  $region12: #{tpu_custom_call.1} parent=0 // pred_region
    _
  $region13: #{tpu_custom_call.1} parent=0 // pred_fallthru
    _
  %s15 = sld [smem:[#allocation2]]
  %v16 = vstv %s15
  %v17 = vmul.f32 %v16, -0.1
  %v18 = vmul.f32 %v17, 1.442695
  %v19 = vpow.pop %v18
  %v20 = vadd.f32 %v19, 1.0
  %v21 = vrcp.pop %v20
  %v22 = vmul.f32 1.0, %v21
  %v23 = vsub.f32 1.0, %v22
  %v24 = vmul.f32 %v23, 0.14285715
  %v25 = vlaneseq
  %v26 = vshrl.u32 %v25, 7
  %v27 = vlaneseq
  %v28 = vand.u32 %v27, 127
  %vm29 = vcmp.eq.s32.totalorder %v26, %v28
  %v30 = vsel %vm29, %v22, %v24
  %v31 = vld [vmem:[%s1] sm:$0xff]
  %v32 = vld [vmem:[%s1 + $0x8] sm:$0xff]
  %v33 = vld [vmem:[%s1 + $0x10] sm:$0xff]
  %v34 = vld [vmem:[%s1 + $0x18] sm:$0xff]
  %vm35 = vcmask 64512
  %v37 = vsel %vm35, %v31, 0
  %v40 = vsel %vm35, %v32, 0
  %v43 = vsel %vm35, %v33, 0
  %v46 = vsel %vm35, %v34, 0
  %48 = vmatprep.subr.mxu0 0.0
  %49 = vmatpush1.msra.mxu0 0.0
  %50 = vmatprep.subr.mxu0 0.0
  %51 = vmatpush1.msra.mxu0 0.0
  %52 = vmatprep.subr.mxu0 0.0
  %53 = vmatpush1.msra.mxu0 0.0
  %54 = vmatprep.subr.mxu0 0.0
  %55 = vmatpush1.msra.mxu0 0.0
  %56 = vmatprep.subr.mxu0 0.0
  %57 = vmatpush1.msra.mxu0 0.0
  %58 = vmatprep.subr.mxu0 0.0
  %59 = vmatpush1.msra.mxu0 0.0
  %60 = vmatprep.subr.mxu0 0.0
  %61 = vmatpush1.msra.mxu0 0.0
  %62 = vmatprep.subr.mxu0 0.0
  %63 = vmatpush1.msra.mxu0 0.0
  %64 = vmatprep.subr.mxu0 0.0
  %65 = vmatpush1.msra.mxu0 0.0
  %66 = vmatprep.subr.mxu0 0.0
  %67 = vmatpush1.msra.mxu0 0.0
  %68 = vmatprep.subr.mxu0 0.0
  %69 = vmatpush1.msra.mxu0 0.0
  %70 = vmatprep.subr.mxu0 0.0
  %71 = vmatpush1.msra.mxu0 0.0
  %72 = vmatprep.subr.mxu0 0.0
  %73 = vmatpush1.msra.mxu0 0.0
  %74 = vmatprep.subr.mxu0 0.0
  %75 = vmatpush1.msra.mxu0 0.0
  %76 = vmatprep.subr.mxu0 0.0
  %77 = vmatpush1.msra.mxu0 0.0
  %78 = vmatprep.subr.mxu0 0.0
  %79 = vmatpush1.msra.mxu0 %v30
  %80 = vmatprep.subr.mxu0 0.0
  %81 = vmatpush2.msra.mxu0 0.0
  %82 = vmatprep.subr.mxu0 0.0
  %83 = vmatpush2.msra.mxu0 0.0
  %84 = vmatprep.subr.mxu0 0.0
  %85 = vmatpush2.msra.mxu0 0.0
  %86 = vmatprep.subr.mxu0 0.0
  %87 = vmatpush2.msra.mxu0 0.0
  %88 = vmatprep.subr.mxu0 0.0
  %89 = vmatpush2.msra.mxu0 0.0
  %90 = vmatprep.subr.mxu0 0.0
  %91 = vmatpush2.msra.mxu0 0.0
  %92 = vmatprep.subr.mxu0 0.0
  %93 = vmatpush2.msra.mxu0 0.0
  %94 = vmatprep.subr.mxu0 0.0
  %95 = vmatpush2.msra.mxu0 0.0
  %96 = vmatprep.subr.mxu0 0.0
  %97 = vmatpush2.msra.mxu0 0.0
  %98 = vmatprep.subr.mxu0 0.0
  %99 = vmatpush2.msra.mxu0 0.0
  %100 = vmatprep.subr.mxu0 0.0
  %101 = vmatpush2.msra.mxu0 0.0
  %102 = vmatprep.subr.mxu0 0.0
  %103 = vmatpush2.msra.mxu0 0.0
  %104 = vmatprep.subr.mxu0 0.0
  %105 = vmatpush2.msra.mxu0 0.0
  %106 = vmatprep.subr.mxu0 0.0
  %107 = vmatpush2.msra.mxu0 0.0
  %108 = vmatprep.subr.mxu0 0.0
  %109 = vmatpush2.msra.mxu0 0.0
  %110 = vmatprep.subr.mxu0 0.0
  %111 = vmatpush2.msra.mxu0 0.0
  %112 = vmatprep.mubr.f32.mxu0 0.0
  %113 = vmatmul.mubr.f32.gmra.mxu0 %v37
  %v114 = vpop.f32.mrf.mxu0
  %v115 = vadd.f32 0.0, %v114
  %v116 = vpop.f32.mrf.mxu0
  %117 = vmatprep.mubr.f32.mxu0 0.0
  %118 = vmatmul.mubr.f32.gmra.mxu0 %v40
  %v119 = vpop.f32.mrf.mxu0
  %v120 = vadd.f32 0.0, %v119
  %v121 = vpop.f32.mrf.mxu0
  %122 = vmatprep.mubr.f32.mxu0 0.0
  %123 = vmatmul.mubr.f32.gmra.mxu0 %v43
  %v124 = vpop.f32.mrf.mxu0
  %v125 = vadd.f32 0.0, %v124
  %v126 = vpop.f32.mrf.mxu0
  %127 = vmatprep.mubr.f32.mxu0 0.0
  %128 = vmatmul.mubr.f32.gmra.mxu0 %v46
  %v129 = vpop.f32.mrf.mxu0
  %v130 = vadd.f32 0.0, %v129
  %v131 = vpop.f32.mrf.mxu0
  %132 = vdwg.mxu0
  %v133 = vadd.s32 %v26, 8
  %vm134 = vcmp.eq.s32.totalorder %v26, 0
  %vm135 = vcmp.eq.s32.totalorder %v133, 0
  %v136 = vsel %vm134, 0.125, %v115
  %v137 = vsel %vm135, 0.125, %v120
  %v138 = vsel %vm134, 0.125, %v125
  %v139 = vsel %vm135, 0.125, %v130
  %v140 = vlog2.pop %v136
  %v141 = vmul.f32 %v140, 0.6931472
  %v142 = vlog2.pop %v137
  %v143 = vmul.f32 %v142, 0.6931472
  %v144 = vlog2.pop %v138
  %v145 = vmul.f32 %v144, 0.6931472
  %v146 = vlog2.pop %v139
  %v147 = vmul.f32 %v146, 0.6931472
  %v148 = vld [vmem:[%s2] sm:$0xff]
  %v149 = vld [vmem:[%s2 + $0x8] sm:$0xff]
  %v150 = vld [vmem:[%s2 + $0x10] sm:$0xff]
  %v151 = vld [vmem:[%s2 + $0x18] sm:$0xff]
  %v152 = vadd.f32 %v141, %v148
  %v153 = vadd.f32 %v143, %v149
  %v154 = vadd.f32 %v145, %v150
  %v155 = vadd.f32 %v147, %v151
  %v156 = vmul.f32 %v152, 2.0
  %v157 = vmul.f32 %v153, 2.0
  %v158 = vmul.f32 %v154, 2.0
  %v159 = vmul.f32 %v155, 2.0
  %v160 = vsel %vm35, %v156, -inf
  %161 = vmax.xlane.f32.xlu0 %v160
  %v162 = vpop.xlane.xlu0 %161
  %v163 = vsel %vm35, %v157, -inf
  %164 = vmax.xlane.f32.xlu0 %v163
  %v165 = vpop.xlane.xlu0 %164
  %v166 = vsel %vm35, %v158, -inf
  %167 = vmax.xlane.f32.xlu0 %v166
  %v168 = vpop.xlane.xlu0 %167
  %v169 = vsel %vm35, %v159, -inf
  %170 = vmax.xlane.f32.xlu0 %v169
  %v171 = vpop.xlane.xlu0 %170
  %v172 = vsub.f32 %v156, %v162
  %v173 = vsub.f32 %v157, %v165
  %v174 = vsub.f32 %v158, %v168
  %v175 = vsub.f32 %v159, %v171
  %v176 = vmul.f32 %v172, 1.442695
  %v177 = vpow.pop %v176
  %v178 = vmul.f32 %v173, 1.442695
  %v179 = vpow.pop %v178
  %v180 = vmul.f32 %v174, 1.442695
  %v181 = vpow.pop %v180
  %v182 = vmul.f32 %v175, 1.442695
  %v183 = vpow.pop %v182
  %v184 = vsel %vm35, %v177, 0.0
  %185 = vadd.xlane.f32.xlu0 %v184
  %v186 = vpop.xlane.xlu0 %185
  %v187 = vsel %vm35, %v179, 0.0
  %188 = vadd.xlane.f32.xlu0 %v187
  %v189 = vpop.xlane.xlu0 %188
  %v190 = vsel %vm35, %v181, 0.0
  %191 = vadd.xlane.f32.xlu0 %v190
  %v192 = vpop.xlane.xlu0 %191
  %v193 = vsel %vm35, %v183, 0.0
  %194 = vadd.xlane.f32.xlu0 %v193
  %v195 = vpop.xlane.xlu0 %194
  %v196 = vrcp.pop %v186
  %v197 = vmul.f32 %v177, %v196
  %v198 = vrcp.pop %v189
  %v199 = vmul.f32 %v179, %v198
  %v200 = vrcp.pop %v192
  %v201 = vmul.f32 %v181, %v200
  %v202 = vrcp.pop %v195
  %v203 = vmul.f32 %v183, %v202
  %204 = vst.msk [vmem:[%s3] sm:$0xff] %vm35, %v197
  %205 = vst.msk [vmem:[%s3 + $0x8] sm:$0xff] %vm35, %v199
  %206 = vst.msk [vmem:[%s3 + $0x10] sm:$0xff] %vm35, %v201
  %207 = vst.msk [vmem:[%s3 + $0x18] sm:$0xff] %vm35, %v203
  // Predicated region
  $region14: #{tpu_custom_call.1} parent=0 // pred_check
    _
  $region15: #{tpu_custom_call.1} parent=0 // pred_check_branch
    %209 = sbr.rel (0) target = $region17
  $region16: #{tpu_custom_call.1} parent=0 // pred_region
    _
  $region17: #{tpu_custom_call.1} parent=0 // pred_fallthru
    _
  // Predicated region
  $region18: #{tpu_custom_call.1} parent=0 // pred_check
    _
  $region19: #{tpu_custom_call.1} parent=0 // pred_check_branch
    %211 = sbr.rel (0) target = $region21
  $region20: #{tpu_custom_call.1} parent=0 // pred_region
    _
  $region21: #{tpu_custom_call.1} parent=0 // pred_fallthru
    _

</llo_original>
